<compile_context>
chip_gen: v6e
topology: v6e:2x2x1
jax: 0.10.0
libtpu: 0.0.40
codegen_flags: <defaults>
</compile_context>

<pallas_src>
import math

import jax
import jax.numpy as jnp
from jax import lax
from jax.experimental import pallas as pl
from jax.experimental.pallas import tpu as pltpu


# ---------------------------------------------------------------------------
# Kernel factory: one (tm, tn) output tile, K streamed in tk chunks on grid
# axis 2.  Weight block is (tn, tk) in the module's native (N, K) layout.
# ---------------------------------------------------------------------------
def _make_linear_kernel(*, has_bias, use_scratch_acc, nk, tk, k_rem, precision):
    def kernel(*refs):
        if has_bias:
            if use_scratch_acc:
                x_ref, w_ref, b_ref, o_ref, acc_ref = refs
            else:
                x_ref, w_ref, b_ref, o_ref = refs
                acc_ref = o_ref          # f32 output: accumulate in place
        else:
            if use_scratch_acc:
                x_ref, w_ref, o_ref, acc_ref = refs
            else:
                x_ref, w_ref, o_ref = refs
                acc_ref = o_ref

        k = pl.program_id(2)

        @pl.when(k == 0)
        def _init():
            acc_ref[...] = jnp.zeros_like(acc_ref)

        x = x_ref[...]
        w = w_ref[...]
        if k_rem:
            # K % tk != 0: zero the out-of-range tail of the last K block
            # in-kernel (cheap VPU mask on both operands, so garbage in the
            # OOB tile region -- including NaN/Inf bit patterns -- can never
            # reach the accumulator).  Replaces the old wrapper-side jnp.pad.
            valid = jnp.where(k == nk - 1, k_rem, tk)
            x = jnp.where(lax.broadcasted_iota(jnp.int32, x.shape, 1) < valid, x, 0)
            w = jnp.where(lax.broadcasted_iota(jnp.int32, w.shape, 1) < valid, w, 0)

        # (tm, tk) x (tn, tk) contracted on K -> (tm, tn); f32 accumulation.
        acc_ref[...] += lax.dot_general(
            x,
            w,
            dimension_numbers=(((1,), (1,)), ((), ())),
            preferred_element_type=jnp.float32,
            precision=precision,
        )

        if has_bias or use_scratch_acc:

            @pl.when(k == nk - 1)
            def _finalize():
                acc = acc_ref[...]
                if has_bias:
                    acc = acc + b_ref[...].astype(jnp.float32)
                o_ref[...] = acc.astype(o_ref.dtype)

    return kernel


# ---------------------------------------------------------------------------
# Generation-aware tile / VMEM selection
# ---------------------------------------------------------------------------
def _target_tiles():
    kind = ""
    try:
        kind = jax.devices()[0].device_kind.lower()
    except Exception:
        pass
    if "v6" in kind:
        # v6e: 918 TF/s vs ~1.4 TB/s HBM -> ~655 f/B break-even; 1024x2048 ~683 (bf16).
        return 1024, 2048, 1024
    if "7" in kind:
        # v7x: ~310 f/B break-even, but only 64 MiB VMEM per TC -> modest tiles.
        return 768, 768, 1024
    if "v5" in kind:
        # v5e: ~240 f/B break-even.
        return 512, 1024, 1024
    return 512, 1024, 1024


def _vmem_capacity_bytes():
    try:
        return int(pltpu.get_tpu_info().vmem_capacity_bytes)
    except Exception:
        return 64 * 1024 * 1024  # conservative (v7x per-TC figure)


# ---------------------------------------------------------------------------
# Wrapper
# ---------------------------------------------------------------------------
def linear_pallas(x, weight, bias=None, *, tm=None, tn=None, tk=None, precision=None):
    """y = x @ weight.T + bias, matching torch.nn.functional.linear.

    x:      (*, input_dim)
    weight: (output_dim, input_dim)   (native layout, never transposed)
    bias:   (output_dim,) or None

    Pass bf16 x / weight for peak MXU throughput (accumulation stays f32).
    f32 operands default to precision=HIGHEST so the f32 path is exact.
    """
    output_dim, input_dim = weight.shape
    assert x.shape[-1] == input_dim

    lead_shape = x.shape[:-1]
    m = int(math.prod(lead_shape)) if lead_shape else 1
    x2d = x.reshape(m, input_dim)
    out_dtype = x.dtype
    use_scratch_acc = jnp.dtype(out_dtype) != jnp.dtype(jnp.float32)

    if precision is None and x2d.dtype == jnp.float32 and weight.dtype == jnp.float32:
        # Default MXU precision may use reduced-precision passes; keep f32 exact.
        precision = lax.Precision.HIGHEST

    # ---- tile selection -----------------------------------------------------
    tm_t, tn_t, tk_t = _target_tiles()
    if tm is None:
        tm = tm_t
    if tn is None:
        tn = tn_t
    if tk is None:
        tk = tk_t

    # Decode-shaped calls (tiny M): purely weight-bandwidth bound -> consume W
    # in as few, large, lane-dense blocks as possible.
    if m <= 256:
        tn = max(tn, 2048)
        tk = max(tk, 2048)

    # Clamp to problem dims.  tm: multiple of 8 (or full M); tn/tk: multiples
    # of 128 (or full dim) -- satisfies the (8, 128) block constraints.
    tm = m if m <= tm else (tm // 8) * 8
    tn = output_dim if output_dim <= tn else (tn // 128) * 128
    tk = input_dim if input_dim <= tk else (tk // 128) * 128

    # ---- VMEM budget check --------------------------------------------------
    phys_vmem = _vmem_capacity_bytes()
    budget = int(0.6 * phys_vmem)  # leave headroom for compiler scratch / sems

    def _vmem_est(tm_, tn_, tk_):
        b = 2 * (
            tm_ * tk_ * x2d.dtype.itemsize
            + tn_ * tk_ * weight.dtype.itemsize
            + tm_ * tn_ * jnp.dtype(out_dtype).itemsize
        )
        if use_scratch_acc:
            b += tm_ * tn_ * 4
        if bias is not None:
            b += 2 * tn_ * bias.dtype.itemsize
        return b

    while _vmem_est(tm, tn, tk) > budget:
        if tk >= 512 and tk % 256 == 0:
            tk //= 2
        elif tn >= 512 and tn % 256 == 0:
            tn //= 2
        elif tm >= 32 and tm % 16 == 0:
            tm //= 2
        else:
            break
    vmem_est = _vmem_est(tm, tn, tk)

    grid = (pl.cdiv(m, tm), pl.cdiv(output_dim, tn), pl.cdiv(input_dim, tk))
    nk = grid[2]
    k_rem = input_dim % tk  # 0 when tk divides K (incl. tk == K)

    x_spec = pl.BlockSpec((tm, tk), lambda i, j, k: (i, k))
    w_spec = pl.BlockSpec((tn, tk), lambda i, j, k: (j, k))  # native (N, K)
    o_spec = pl.BlockSpec((tm, tn), lambda i, j, k: (i, j))

    # Advisory cost estimate reflecting actual HBM traffic including re-reads.
    flops = 2 * m * output_dim * input_dim
    bytes_accessed = (
        grid[1] * m * input_dim * x2d.dtype.itemsize          # x read grid_n times
        + grid[0] * output_dim * input_dim * weight.dtype.itemsize  # W read grid_m times
        + m * output_dim * jnp.dtype(out_dtype).itemsize       # output written once
    )
    if bias is not None:
        bytes_accessed += grid[0] * output_dim * bias.dtype.itemsize
    cost = pl.CostEstimate(
        flops=int(flops), transcendentals=0, bytes_accessed=int(bytes_accessed)
    )

    vmem_limit = int(min(int(0.75 * phys_vmem), max(32 * 1024 * 1024, 2 * vmem_est)))

    # M/N shard across TensorCores on megacore parts; K innermost for the
    # resident accumulator.
    # TODO(synk): profile per-core occupancy on v7x; fall back to an explicit
    # core-split leading grid axis if only one TC is busy.
    compiler_params = pltpu.CompilerParams(
        dimension_semantics=("parallel", "parallel", "arbitrary"),
        vmem_limit_bytes=vmem_limit,
    )

    scratch = [pltpu.VMEM((tm, tn), jnp.float32)] if use_scratch_acc else []

    kernel = _make_linear_kernel(
        has_bias=bias is not None,
        use_scratch_acc=use_scratch_acc,
        nk=nk,
        tk=tk,
        k_rem=k_rem,
        precision=precision,
    )

    if bias is None:
        operands = (x2d, weight)
        in_specs = [x_spec, w_spec]
    else:
        b2d = bias.reshape(1, output_dim)
        b_spec = pl.BlockSpec((1, tn), lambda i, j, k: (0, j))
        operands = (x2d, weight, b2d)
        in_specs = [x_spec, w_spec, b_spec]

    out2d = pl.pallas_call(
        kernel,
        out_shape=jax.ShapeDtypeStruct((m, output_dim), out_dtype),
        grid_spec=pltpu.PrefetchScalarGridSpec(
            num_scalar_prefetch=0,
            grid=grid,
            in_specs=in_specs,
            out_specs=o_spec,
            scratch_shapes=scratch,
        ),
        compiler_params=compiler_params,
        cost_estimate=cost,
    )(*operands)

    return out2d.reshape(*lead_shape, output_dim)


# ---------------------------------------------------------------------------
# Deterministic parameter init replicating fairseq2's _init_uniform:
#   kaiming_uniform_(weight, a=sqrt(5))  ==  U(-1/sqrt(fan_in), 1/sqrt(fan_in))
#   bias ~ U(-1/sqrt(fan_in), 1/sqrt(fan_in))
# ---------------------------------------------------------------------------
def init_linear_params(key, input_dim, output_dim, use_bias=True, dtype=jnp.float32):
    k_w, k_b = jax.random.split(key)
    bound = 1.0 / math.sqrt(input_dim) if input_dim > 0 else 0.0
    weight = jax.random.uniform(
        k_w, (output_dim, input_dim), dtype=dtype, minval=-bound, maxval=bound
    )
    bias = None
    if use_bias:
        bias = jax.random.uniform(
            k_b, (output_dim,), dtype=dtype, minval=-bound, maxval=bound
        )
    return weight, bias


if __name__ == "__main__":
    key = jax.random.PRNGKey(0)
    k_x, k_p = jax.random.split(key)

    batch, seq, input_dim, output_dim = 2, 8, 32, 128

    x = jax.random.normal(k_x, (batch, seq, input_dim), dtype=jnp.float32)
    weight, bias = init_linear_params(k_p, input_dim, output_dim, use_bias=True)

    # f32 + bias path (accumulates directly in the output block)
    y = jax.block_until_ready(linear_pallas(x, weight, bias))
    y_ref = (
        jnp.einsum("bsi,oi->bso", x, weight, precision=lax.Precision.HIGHEST) + bias
    )
    assert y.shape == (batch, seq, output_dim)
    assert jnp.allclose(y, y_ref, atol=1e-5, rtol=1e-5)

    # f32 no-bias path
    y_nb = jax.block_until_ready(linear_pallas(x, weight, None))
    y_nb_ref = jnp.einsum("bsi,oi->bso", x, weight, precision=lax.Precision.HIGHEST)
    assert jnp.allclose(y_nb, y_nb_ref, atol=1e-5, rtol=1e-5)

    # bf16 fast path (exercises the f32 scratch-accumulator kernel)
    xb = x.astype(jnp.bfloat16)
    wb = weight.astype(jnp.bfloat16)
    bb = bias.astype(jnp.bfloat16)
    yb = jax.block_until_ready(linear_pallas(xb, wb, bb))
    yb_ref = (
        jnp.einsum(
            "bsi,oi->bso",
            xb.astype(jnp.float32),
            wb.astype(jnp.float32),
            precision=lax.Precision.HIGHEST,
        )
        + bb.astype(jnp.float32)
    )
    assert yb.dtype == jnp.bfloat16
    assert jnp.allclose(
        yb.astype(jnp.float32), yb_ref, atol=5e-2, rtol=5e-2
    )

    print("KERNEL_OK")
</pallas_src>

<mosaic_0001>
module attributes {stable_mosaic.version = 11 : i64} {
  func.func @kernel(%arg0: i32, %arg1: i32, %arg2: i32, %arg3: memref<16x32xf32, #tpu.memory_space<vmem>>, %arg4: memref<128x32xf32, #tpu.memory_space<vmem>>, %arg5: memref<1x128xf32, #tpu.memory_space<vmem>>, %arg6: memref<16x128xf32, #tpu.memory_space<vmem>>) attributes {dimension_semantics = [#tpu.dimension_semantics<parallel>, #tpu.dimension_semantics<parallel>, #tpu.dimension_semantics<arbitrary>], iteration_bounds = array<i64: 1, 1, 1>, scalar_prefetch = 0 : i64, scratch_operands = 0 : i64, tpu.core_type = #tpu.core_type<tc>, window_params = [{transform_indices = @transform_0, window_bounds = array<i64: 16, 32>}, {transform_indices = @transform_1, window_bounds = array<i64: 128, 32>}, {transform_indices = @transform_2, window_bounds = array<i64: 1, 128>}, {transform_indices = @transform_3, window_bounds = array<i64: 16, 128>}]} {
    %c0_i32 = arith.constant 0 : i32
    %0 = arith.cmpi eq, %arg2, %c0_i32 : i32
    %1 = arith.extui %0 : i1 to i32
    %c0_i32_0 = arith.constant 0 : i32
    %2 = arith.cmpi ne, %1, %c0_i32_0 : i32
    scf.if %2 {
      %cst_10 = arith.constant 0.000000e+00 : f32
      %12 = vector.broadcast %cst_10 : f32 to vector<16x128xf32>
      %c0_11 = arith.constant 0 : index
      %c0_12 = arith.constant 0 : index
      %13 = vector.load %arg6[%c0_11, %c0_12] : memref<16x128xf32, #tpu.memory_space<vmem>>, vector<16x128xf32>
      tpu.vector_store %arg6[%c0_11, %c0_12], %12 {strides = array<i32>} : memref<16x128xf32, #tpu.memory_space<vmem>>, vector<16x128xf32>,
    } else {
    }
    %c0 = arith.constant 0 : index
    %c0_1 = arith.constant 0 : index
    %3 = vector.load %arg3[%c0, %c0_1] : memref<16x32xf32, #tpu.memory_space<vmem>>, vector<16x32xf32>
    %c0_2 = arith.constant 0 : index
    %c0_3 = arith.constant 0 : index
    %4 = vector.load %arg4[%c0_2, %c0_3] : memref<128x32xf32, #tpu.memory_space<vmem>>, vector<128x32xf32>
    %c0_4 = arith.constant 0 : index
    %c0_5 = arith.constant 0 : index
    %5 = vector.load %arg6[%c0_4, %c0_5] : memref<16x128xf32, #tpu.memory_space<vmem>>, vector<16x128xf32>
    %cst = arith.constant dense<0.000000e+00> : vector<16x128xf32>
    %6 = tpu.matmul %3, %4, %cst {dimension_numbers = #tpu.dot_dimension_numbers<[1], [1], [0], [0], [0, 0, 1, 0], [], []>, precision = #tpu.contract_precision<fp32>} : vector<16x32xf32>, vector<128x32xf32>, vector<16x128xf32> -> vector<16x128xf32>
    %7 = arith.addf %5, %6 : vector<16x128xf32>
    %c0_6 = arith.constant 0 : index
    %c0_7 = arith.constant 0 : index
    %8 = vector.load %arg6[%c0_6, %c0_7] : memref<16x128xf32, #tpu.memory_space<vmem>>, vector<16x128xf32>
    tpu.vector_store %arg6[%c0_6, %c0_7], %7 {strides = array<i32>} : memref<16x128xf32, #tpu.memory_space<vmem>>, vector<16x128xf32>,
    %c0_i32_8 = arith.constant 0 : i32
    %9 = arith.cmpi eq, %arg2, %c0_i32_8 : i32
    %10 = arith.extui %9 : i1 to i32
    %c0_i32_9 = arith.constant 0 : i32
    %11 = arith.cmpi ne, %10, %c0_i32_9 : i32
    scf.if %11 {
      %c0_10 = arith.constant 0 : index
      %c0_11 = arith.constant 0 : index
      %12 = vector.load %arg6[%c0_10, %c0_11] : memref<16x128xf32, #tpu.memory_space<vmem>>, vector<16x128xf32>
      %c0_12 = arith.constant 0 : index
      %c0_13 = arith.constant 0 : index
      %13 = vector.load %arg5[%c0_12, %c0_13] : memref<1x128xf32, #tpu.memory_space<vmem>>, vector<1x128xf32>
      %14 = vector.broadcast %13 : vector<1x128xf32> to vector<16x128xf32>
      %15 = arith.addf %12, %14 : vector<16x128xf32>
      %c0_14 = arith.constant 0 : index
      %c0_15 = arith.constant 0 : index
      %16 = vector.load %arg6[%c0_14, %c0_15] : memref<16x128xf32, #tpu.memory_space<vmem>>, vector<16x128xf32>
      tpu.vector_store %arg6[%c0_14, %c0_15], %15 {strides = array<i32>} : memref<16x128xf32, #tpu.memory_space<vmem>>, vector<16x128xf32>,
    } else {
    }
    return
  }
  func.func @transform_0(%arg0: i32, %arg1: i32, %arg2: i32) -> (i32, i32) {
    %c0_i32 = arith.constant 0 : i32
    return %arg0, %arg2 : i32, i32
  }
  func.func @transform_1(%arg0: i32, %arg1: i32, %arg2: i32) -> (i32, i32) {
    %c0_i32 = arith.constant 0 : i32
    return %arg1, %arg2 : i32, i32
  }
  func.func @transform_2(%arg0: i32, %arg1: i32, %arg2: i32) -> (i32, i32) {
    %c0_i32 = arith.constant 0 : i32
    %c0_i32_0 = arith.constant 0 : i32
    return %c0_i32, %arg1 : i32, i32
  }
  func.func @transform_3(%arg0: i32, %arg1: i32, %arg2: i32) -> (i32, i32) {
    %c0_i32 = arith.constant 0 : i32
    return %arg0, %arg1 : i32, i32
  }
}

</mosaic_0001>

<llo_original>
// kernel: tpu_custom_call.1
$region0: #{tpu_custom_call.1}
  #allocation0 [shape = 'u32[]', space=smem, size = 0x4, offset = 0x4, fixed_abs, tag = 'smem constant byte address 0x4 - core index']
  #allocation1 [shape = 'u32[144,128]{1,0:T(1,128)}', space=vmem, size = 0x12000, scoped, tag = 'internal scratch']
  %s0 = inlined_call_operand.vmem [shape: f32[16,32], index: 0, kind: input, shape index: {}]
  %s1 = inlined_call_operand.vmem [shape: f32[128,32], index: 1, kind: input, shape index: {}]
  %s2 = inlined_call_operand.vmem [shape: f32[1,128], index: 2, kind: input, shape index: {}]
  %s3 = inlined_call_operand.hbm [shape: f32[16,128], index: 3, kind: output, shape index: {}]
  %s4 = sld [smem:[#allocation0]]
  $region30: #{tpu_custom_call.1} parent=0
    _
  %s6 = ssub.s32 1, %s4
  %s7 = scalar_select 0, %s6, %s4
  $region1: #{tpu_custom_call.1} parent=0
    #allocation2 [shape = 'u8[8192]{0}', space=vmem, size = 0x2000, scoped, tag = 'output window, operand 0, single buffered']
    #allocation3 [shape = 's32[1]{0}', space=sflag, size = 0x4, scoped, tag = 'scoped memory for tpu_custom_call.1']
    %8 = vsyncpa [#allocation3], 0
    // Predicated region
    $region2: #{tpu_custom_call.1} parent=1 // pred_check
      _
    $region3: #{tpu_custom_call.1} parent=1 // pred_check_branch
      %10 = sbr.rel (0) target = $region5
    $region4: #{tpu_custom_call.1} parent=1 // pred_region
      _
    $region5: #{tpu_custom_call.1} parent=1 // pred_fallthru
      _
    // Predicated region
    $region6: #{tpu_custom_call.1} parent=1 // pred_check
      _
    $region7: #{tpu_custom_call.1} parent=1 // pred_check_branch
      %12 = sbr.rel (0) target = $region9
    $region8: #{tpu_custom_call.1} parent=1 // pred_region
      _
    $region9: #{tpu_custom_call.1} parent=1 // pred_fallthru
      _
    // Predicated region
    $region10: #{tpu_custom_call.1} parent=1 // pred_check
      _
    $region11: #{tpu_custom_call.1} parent=1 // pred_check_branch
      %14 = sbr.rel (0) target = $region13
    $region12: #{tpu_custom_call.1} parent=1 // pred_region
      _
    $region13: #{tpu_custom_call.1} parent=1 // pred_fallthru
      _
    %p15 = scmp.eq.s32.totalorder 0, 0
    // Predicated region
    $region14: #{tpu_custom_call.1} parent=1 // pred_check
      %p16 = pneg %p15
    $region15: #{tpu_custom_call.1} parent=1 // pred_check_branch
      %18 = sbr.rel (%p16) target = $region17
    $region16: #{tpu_custom_call.1} parent=1 // pred_region
      %19 = vst [vmem:[#allocation2] sm:$0xff] 0.0
      %20 = vst [vmem:[#allocation2 + $0x8] sm:$0xff] 0.0
    $region17: #{tpu_custom_call.1} parent=1 // pred_fallthru
      _
    %v21 = vld [vmem:[%s0] sm:$0xff]
    %v22 = vld [vmem:[%s0 + $0x8] sm:$0xff]
    %v23 = vld [vmem:[%s1] sm:$0xff]
    %v24 = vld [vmem:[%s1 + $0x8] sm:$0xff]
    %v25 = vld [vmem:[%s1 + $0x10] sm:$0xff]
    %v26 = vld [vmem:[%s1 + $0x18] sm:$0xff]
    %v27 = vld [vmem:[%s1 + $0x20] sm:$0xff]
    %v28 = vld [vmem:[%s1 + $0x28] sm:$0xff]
    %v29 = vld [vmem:[%s1 + $0x30] sm:$0xff]
    %v30 = vld [vmem:[%s1 + $0x38] sm:$0xff]
    %v31 = vld [vmem:[%s1 + $0x40] sm:$0xff]
    %v32 = vld [vmem:[%s1 + $0x48] sm:$0xff]
    %v33 = vld [vmem:[%s1 + $0x50] sm:$0xff]
    %v34 = vld [vmem:[%s1 + $0x58] sm:$0xff]
    %v35 = vld [vmem:[%s1 + $0x60] sm:$0xff]
    %v36 = vld [vmem:[%s1 + $0x68] sm:$0xff]
    %v37 = vld [vmem:[%s1 + $0x70] sm:$0xff]
    %v38 = vld [vmem:[%s1 + $0x78] sm:$0xff]
    %v39 = vld [vmem:[#allocation2] sm:$0xff]
    %v40 = vld [vmem:[#allocation2 + $0x8] sm:$0xff]
    %vm41 = vcmask 261120
    %v43 = vsel %vm41, %v21, 0
    %v46 = vsel %vm41, %v22, 0
    %v49 = vsel %vm41, %v23, 0
    %v52 = vsel %vm41, %v24, 0
    %v55 = vsel %vm41, %v25, 0
    %v58 = vsel %vm41, %v26, 0
    %v61 = vsel %vm41, %v27, 0
    %v64 = vsel %vm41, %v28, 0
    %v67 = vsel %vm41, %v29, 0
    %v70 = vsel %vm41, %v30, 0
    %v73 = vsel %vm41, %v31, 0
    %v76 = vsel %vm41, %v32, 0
    %v79 = vsel %vm41, %v33, 0
    %v82 = vsel %vm41, %v34, 0
    %v85 = vsel %vm41, %v35, 0
    %v88 = vsel %vm41, %v36, 0
    %v91 = vsel %vm41, %v37, 0
    %v94 = vsel %vm41, %v38, 0
    %96 = vmatprep.subr.mxu0 0.0
    %v97 = vand.u32 %v94, 4294901760
    %98 = vmatpush1.xpose.msra.mxu0 %v97
    %99 = vmatprep.subr.mxu0 0.0
    %v100 = vand.u32 %v91, 4294901760
    %101 = vmatpush1.xpose.msra.mxu0 %v100
    %102 = vmatprep.subr.mxu0 0.0
    %v103 = vand.u32 %v88, 4294901760
    %104 = vmatpush1.xpose.msra.mxu0 %v103
    %105 = vmatprep.subr.mxu0 0.0
    %v106 = vand.u32 %v85, 4294901760
    %107 = vmatpush1.xpose.msra.mxu0 %v106
    %108 = vmatprep.subr.mxu0 0.0
    %v109 = vand.u32 %v82, 4294901760
    %110 = vmatpush1.xpose.msra.mxu0 %v109
    %111 = vmatprep.subr.mxu0 0.0
    %v112 = vand.u32 %v79, 4294901760
    %113 = vmatpush1.xpose.msra.mxu0 %v112
    %114 = vmatprep.subr.mxu0 0.0
    %v115 = vand.u32 %v76, 4294901760
    %116 = vmatpush1.xpose.msra.mxu0 %v115
    %117 = vmatprep.subr.mxu0 0.0
    %v118 = vand.u32 %v73, 4294901760
    %119 = vmatpush1.xpose.msra.mxu0 %v118
    %120 = vmatprep.subr.mxu0 0.0
    %v121 = vand.u32 %v70, 4294901760
    %122 = vmatpush1.xpose.msra.mxu0 %v121
    %123 = vmatprep.subr.mxu0 0.0
    %v124 = vand.u32 %v67, 4294901760
    %125 = vmatpush1.xpose.msra.mxu0 %v124
    %126 = vmatprep.subr.mxu0 0.0
    %v127 = vand.u32 %v64, 4294901760
    %128 = vmatpush1.xpose.msra.mxu0 %v127
    %129 = vmatprep.subr.mxu0 0.0
    %v130 = vand.u32 %v61, 4294901760
    %131 = vmatpush1.xpose.msra.mxu0 %v130
    %132 = vmatprep.subr.mxu0 0.0
    %v133 = vand.u32 %v58, 4294901760
    %134 = vmatpush1.xpose.msra.mxu0 %v133
    %135 = vmatprep.subr.mxu0 0.0
    %v136 = vand.u32 %v55, 4294901760
    %137 = vmatpush1.xpose.msra.mxu0 %v136
    %138 = vmatprep.subr.mxu0 0.0
    %v139 = vand.u32 %v52, 4294901760
    %140 = vmatpush1.xpose.msra.mxu0 %v139
    %141 = vmatprep.subr.mxu0 0.0
    %v142 = vand.u32 %v49, 4294901760
    %143 = vmatpush1.xpose.msra.mxu0 %v142
    %144 = vmatprep.subr.mxu0 0.0
    %145 = vmatpush2.xpose.msra.mxu0 0.0
    %146 = vmatprep.subr.mxu0 0.0
    %147 = vmatpush2.xpose.msra.mxu0 0.0
    %148 = vmatprep.subr.mxu0 0.0
    %149 = vmatpush2.xpose.msra.mxu0 0.0
    %150 = vmatprep.subr.mxu0 0.0
    %151 = vmatpush2.xpose.msra.mxu0 0.0
    %152 = vmatprep.subr.mxu0 0.0
    %153 = vmatpush2.xpose.msra.mxu0 0.0
    %154 = vmatprep.subr.mxu0 0.0
    %155 = vmatpush2.xpose.msra.mxu0 0.0
    %156 = vmatprep.subr.mxu0 0.0
    %157 = vmatpush2.xpose.msra.mxu0 0.0
    %158 = vmatprep.subr.mxu0 0.0
    %159 = vmatpush2.xpose.msra.mxu0 0.0
    %160 = vmatprep.subr.mxu0 0.0
    %161 = vmatpush2.xpose.msra.mxu0 0.0
    %162 = vmatprep.subr.mxu0 0.0
    %163 = vmatpush2.xpose.msra.mxu0 0.0
    %164 = vmatprep.subr.mxu0 0.0
    %165 = vmatpush2.xpose.msra.mxu0 0.0
    %166 = vmatprep.subr.mxu0 0.0
    %167 = vmatpush2.xpose.msra.mxu0 0.0
    %168 = vmatprep.subr.mxu0 0.0
    %169 = vmatpush2.xpose.msra.mxu0 0.0
    %170 = vmatprep.subr.mxu0 0.0
    %171 = vmatpush2.xpose.msra.mxu0 0.0
    %172 = vmatprep.subr.mxu0 0.0
    %173 = vmatpush2.xpose.msra.mxu0 0.0
    %174 = vmatprep.subr.mxu0 0.0
    %175 = vmatpush2.xpose.msra.mxu0 0.0
    %176 = vmatprep.mubr.f32.mxu0 0.0
    %v177 = vand.u32 %v43, 4294901760
    %v178 = vsub.f32 %v43, %v177
    %v179 = vand.u32 %v178, 4294901760
    %v180 = vsub.f32 %v178, %v179
    %v181 = vand.u32 %v180, 4294901760
    %182 = vmatmul.mubr.f32.gmra.mxu0 %v181
    %v183 = vpop.f32.mrf.mxu0
    %v184 = vadd.f32 0.0, %v183
    %v185 = vpop.f32.mrf.mxu0
    %186 = vmatprep.mubr.f32.mxu0 0.0
    %v187 = vand.u32 %v46, 4294901760
    %v188 = vsub.f32 %v46, %v187
    %v189 = vand.u32 %v188, 4294901760
    %v190 = vsub.f32 %v188, %v189
    %v191 = vand.u32 %v190, 4294901760
    %192 = vmatmul.mubr.f32.gmra.mxu0 %v191
    %v193 = vpop.f32.mrf.mxu0
    %v194 = vadd.f32 0.0, %v193
    %v195 = vpop.f32.mrf.mxu0
    %196 = vdwg.mxu0
    %197 = vmatprep.subr.mxu0 0.0
    %v198 = vand.u32 %v94, 4294901760
    %v199 = vsub.f32 %v94, %v198
    %v200 = vand.u32 %v199, 4294901760
    %v201 = vsub.f32 %v199, %v200
    %v202 = vand.u32 %v201, 4294901760
    %203 = vmatpush1.xpose.msra.mxu0 %v202
    %204 = vmatprep.subr.mxu0 0.0
    %v205 = vand.u32 %v91, 4294901760
    %v206 = vsub.f32 %v91, %v205
    %v207 = vand.u32 %v206, 4294901760
    %v208 = vsub.f32 %v206, %v207
    %v209 = vand.u32 %v208, 4294901760
    %210 = vmatpush1.xpose.msra.mxu0 %v209
    %211 = vmatprep.subr.mxu0 0.0
    %v212 = vand.u32 %v88, 4294901760
    %v213 = vsub.f32 %v88, %v212
    %v214 = vand.u32 %v213, 4294901760
    %v215 = vsub.f32 %v213, %v214
    %v216 = vand.u32 %v215, 4294901760
    %217 = vmatpush1.xpose.msra.mxu0 %v216
    %218 = vmatprep.subr.mxu0 0.0
    %v219 = vand.u32 %v85, 4294901760
    %v220 = vsub.f32 %v85, %v219
    %v221 = vand.u32 %v220, 4294901760
    %v222 = vsub.f32 %v220, %v221
    %v223 = vand.u32 %v222, 4294901760
    %224 = vmatpush1.xpose.msra.mxu0 %v223
    %225 = vmatprep.subr.mxu0 0.0
    %v226 = vand.u32 %v82, 4294901760
    %v227 = vsub.f32 %v82, %v226
    %v228 = vand.u32 %v227, 4294901760
    %v229 = vsub.f32 %v227, %v228
    %v230 = vand.u32 %v229, 4294901760
    %231 = vmatpush1.xpose.msra.mxu0 %v230
    %232 = vmatprep.subr.mxu0 0.0
    %v233 = vand.u32 %v79, 4294901760
    %v234 = vsub.f32 %v79, %v233
    %v235 = vand.u32 %v234, 4294901760
    %v236 = vsub.f32 %v234, %v235
    %v237 = vand.u32 %v236, 4294901760
    %238 = vmatpush1.xpose.msra.mxu0 %v237
    %239 = vmatprep.subr.mxu0 0.0
    %v240 = vand.u32 %v76, 4294901760
    %v241 = vsub.f32 %v76, %v240
    %v242 = vand.u32 %v241, 4294901760
    %v243 = vsub.f32 %v241, %v242
    %v244 = vand.u32 %v243, 4294901760
    %245 = vmatpush1.xpose.msra.mxu0 %v244
    %246 = vmatprep.subr.mxu0 0.0
    %v247 = vand.u32 %v73, 4294901760
    %v248 = vsub.f32 %v73, %v247
    %v249 = vand.u32 %v248, 4294901760
    %v250 = vsub.f32 %v248, %v249
    %v251 = vand.u32 %v250, 4294901760
    %252 = vmatpush1.xpose.msra.mxu0 %v251
    %253 = vmatprep.subr.mxu0 0.0
    %v254 = vand.u32 %v70, 4294901760
    %v255 = vsub.f32 %v70, %v254
    %v256 = vand.u32 %v255, 4294901760
    %v257 = vsub.f32 %v255, %v256
    %v258 = vand.u32 %v257, 4294901760
    %259 = vmatpush1.xpose.msra.mxu0 %v258
    %260 = vmatprep.subr.mxu0 0.0
    %v261 = vand.u32 %v67, 4294901760
    %v262 = vsub.f32 %v67, %v261
    %v263 = vand.u32 %v262, 4294901760
    %v264 = vsub.f32 %v262, %v263
    %v265 = vand.u32 %v264, 4294901760
    %266 = vmatpush1.xpose.msra.mxu0 %v265
    %267 = vmatprep.subr.mxu0 0.0
    %v268 = vand.u32 %v64, 4294901760
    %v269 = vsub.f32 %v64, %v268
    %v270 = vand.u32 %v269, 4294901760
    %v271 = vsub.f32 %v269, %v270
    %v272 = vand.u32 %v271, 4294901760
    %273 = vmatpush1.xpose.msra.mxu0 %v272
    %274 = vmatprep.subr.mxu0 0.0
    %v275 = vand.u32 %v61, 4294901760
    %v276 = vsub.f32 %v61, %v275
    %v277 = vand.u32 %v276, 4294901760
    %v278 = vsub.f32 %v276, %v277
    %v279 = vand.u32 %v278, 4294901760
    %280 = vmatpush1.xpose.msra.mxu0 %v279
    %281 = vmatprep.subr.mxu0 0.0
    %v282 = vand.u32 %v58, 4294901760
    %v283 = vsub.f32 %v58, %v282
    %v284 = vand.u32 %v283, 4294901760
    %v285 = vsub.f32 %v283, %v284
    %v286 = vand.u32 %v285, 4294901760
    %287 = vmatpush1.xpose.msra.mxu0 %v286
    %288 = vmatprep.subr.mxu0 0.0
    %v289 = vand.u32 %v55, 4294901760
    %v290 = vsub.f32 %v55, %v289
    %v291 = vand.u32 %v290, 4294901760
    %v292 = vsub.f32 %v290, %v291
    %v293 = vand.u32 %v292, 4294901760
    %294 = vmatpush1.xpose.msra.mxu0 %v293
    %295 = vmatprep.subr.mxu0 0.0
    %v296 = vand.u32 %v52, 4294901760
    %v297 = vsub.f32 %v52, %v296
    %v298 = vand.u32 %v297, 4294901760
    %v299 = vsub.f32 %v297, %v298
    %v300 = vand.u32 %v299, 4294901760
    %301 = vmatpush1.xpose.msra.mxu0 %v300
    %302 = vmatprep.subr.mxu0 0.0
    %v303 = vand.u32 %v49, 4294901760
    %v304 = vsub.f32 %v49, %v303
    %v305 = vand.u32 %v304, 4294901760
    %v306 = vsub.f32 %v304, %v305
    %v307 = vand.u32 %v306, 4294901760
    %308 = vmatpush1.xpose.msra.mxu0 %v307
    %309 = vmatprep.subr.mxu0 0.0
    %310 = vmatpush2.xpose.msra.mxu0 0.0
    %311 = vmatprep.subr.mxu0 0.0
    %312 = vmatpush2.xpose.msra.mxu0 0.0
    %313 = vmatprep.subr.mxu0 0.0
    %314 = vmatpush2.xpose.msra.mxu0 0.0
    %315 = vmatprep.subr.mxu0 0.0
    %316 = vmatpush2.xpose.msra.mxu0 0.0
    %317 = vmatprep.subr.mxu0 0.0
    %318 = vmatpush2.xpose.msra.mxu0 0.0
    %319 = vmatprep.subr.mxu0 0.0
    %320 = vmatpush2.xpose.msra.mxu0 0.0
    %321 = vmatprep.subr.mxu0 0.0
    %322 = vmatpush2.xpose.msra.mxu0 0.0
    %323 = vmatprep.subr.mxu0 0.0
    %324 = vmatpush2.xpose.msra.mxu0 0.0
    %325 = vmatprep.subr.mxu0 0.0
    %326 = vmatpush2.xpose.msra.mxu0 0.0
    %327 = vmatprep.subr.mxu0 0.0
    %328 = vmatpush2.xpose.msra.mxu0 0.0
    %329 = vmatprep.subr.mxu0 0.0
    %330 = vmatpush2.xpose.msra.mxu0 0.0
    %331 = vmatprep.subr.mxu0 0.0
    %332 = vmatpush2.xpose.msra.mxu0 0.0
    %333 = vmatprep.subr.mxu0 0.0
    %334 = vmatpush2.xpose.msra.mxu0 0.0
    %335 = vmatprep.subr.mxu0 0.0
    %336 = vmatpush2.xpose.msra.mxu0 0.0
    %337 = vmatprep.subr.mxu0 0.0
    %338 = vmatpush2.xpose.msra.mxu0 0.0
    %339 = vmatprep.subr.mxu0 0.0
    %340 = vmatpush2.xpose.msra.mxu0 0.0
    %341 = vmatprep.mubr.f32.mxu0 0.0
    %v342 = vand.u32 %v43, 4294901760
    %343 = vmatmul.mubr.f32.gmra.mxu0 %v342
    %v344 = vpop.f32.mrf.mxu0
    %v345 = vadd.f32 %v184, %v344
    %v346 = vpop.f32.mrf.mxu0
    %347 = vmatprep.mubr.f32.mxu0 0.0
    %v348 = vand.u32 %v46, 4294901760
    %349 = vmatmul.mubr.f32.gmra.mxu0 %v348
    %v350 = vpop.f32.mrf.mxu0
    %v351 = vadd.f32 %v194, %v350
    %v352 = vpop.f32.mrf.mxu0
    %353 = vdwg.mxu0
    %354 = vmatprep.subr.mxu0 0.0
    %v355 = vand.u32 %v94, 4294901760
    %v356 = vsub.f32 %v94, %v355
    %357 = vmatpush1.xpose.msra.mxu0 %v356
    %358 = vmatprep.subr.mxu0 0.0
    %v359 = vand.u32 %v91, 4294901760
    %v360 = vsub.f32 %v91, %v359
    %361 = vmatpush1.xpose.msra.mxu0 %v360
    %362 = vmatprep.subr.mxu0 0.0
    %v363 = vand.u32 %v88, 4294901760
    %v364 = vsub.f32 %v88, %v363
    %365 = vmatpush1.xpose.msra.mxu0 %v364
    %366 = vmatprep.subr.mxu0 0.0
    %v367 = vand.u32 %v85, 4294901760
    %v368 = vsub.f32 %v85, %v367
    %369 = vmatpush1.xpose.msra.mxu0 %v368
    %370 = vmatprep.subr.mxu0 0.0
    %v371 = vand.u32 %v82, 4294901760
    %v372 = vsub.f32 %v82, %v371
    %373 = vmatpush1.xpose.msra.mxu0 %v372
    %374 = vmatprep.subr.mxu0 0.0
    %v375 = vand.u32 %v79, 4294901760
    %v376 = vsub.f32 %v79, %v375
    %377 = vmatpush1.xpose.msra.mxu0 %v376
    %378 = vmatprep.subr.mxu0 0.0
    %v379 = vand.u32 %v76, 4294901760
    %v380 = vsub.f32 %v76, %v379
    %381 = vmatpush1.xpose.msra.mxu0 %v380
    %382 = vmatprep.subr.mxu0 0.0
    %v383 = vand.u32 %v73, 4294901760
    %v384 = vsub.f32 %v73, %v383
    %385 = vmatpush1.xpose.msra.mxu0 %v384
    %386 = vmatprep.subr.mxu0 0.0
    %v387 = vand.u32 %v70, 4294901760
    %v388 = vsub.f32 %v70, %v387
    %389 = vmatpush1.xpose.msra.mxu0 %v388
    %390 = vmatprep.subr.mxu0 0.0
    %v391 = vand.u32 %v67, 4294901760
    %v392 = vsub.f32 %v67, %v391
    %393 = vmatpush1.xpose.msra.mxu0 %v392
    %394 = vmatprep.subr.mxu0 0.0
    %v395 = vand.u32 %v64, 4294901760
    %v396 = vsub.f32 %v64, %v395
    %397 = vmatpush1.xpose.msra.mxu0 %v396
    %398 = vmatprep.subr.mxu0 0.0
    %v399 = vand.u32 %v61, 4294901760
    %v400 = vsub.f32 %v61, %v399
    %401 = vmatpush1.xpose.msra.mxu0 %v400
    %402 = vmatprep.subr.mxu0 0.0
    %v403 = vand.u32 %v58, 4294901760
    %v404 = vsub.f32 %v58, %v403
    %405 = vmatpush1.xpose.msra.mxu0 %v404
    %406 = vmatprep.subr.mxu0 0.0
    %v407 = vand.u32 %v55, 4294901760
    %v408 = vsub.f32 %v55, %v407
    %409 = vmatpush1.xpose.msra.mxu0 %v408
    %410 = vmatprep.subr.mxu0 0.0
    %v411 = vand.u32 %v52, 4294901760
    %v412 = vsub.f32 %v52, %v411
    %413 = vmatpush1.xpose.msra.mxu0 %v412
    %414 = vmatprep.subr.mxu0 0.0
    %v415 = vand.u32 %v49, 4294901760
    %v416 = vsub.f32 %v49, %v415
    %417 = vmatpush1.xpose.msra.mxu0 %v416
    %418 = vmatprep.subr.mxu0 0.0
    %419 = vmatpush2.xpose.msra.mxu0 0.0
    %420 = vmatprep.subr.mxu0 0.0
    %421 = vmatpush2.xpose.msra.mxu0 0.0
    %422 = vmatprep.subr.mxu0 0.0
    %423 = vmatpush2.xpose.msra.mxu0 0.0
    %424 = vmatprep.subr.mxu0 0.0
    %425 = vmatpush2.xpose.msra.mxu0 0.0
    %426 = vmatprep.subr.mxu0 0.0
    %427 = vmatpush2.xpose.msra.mxu0 0.0
    %428 = vmatprep.subr.mxu0 0.0
    %429 = vmatpush2.xpose.msra.mxu0 0.0
    %430 = vmatprep.subr.mxu0 0.0
    %431 = vmatpush2.xpose.msra.mxu0 0.0
    %432 = vmatprep.subr.mxu0 0.0
    %433 = vmatpush2.xpose.msra.mxu0 0.0
    %434 = vmatprep.subr.mxu0 0.0
    %435 = vmatpush2.xpose.msra.mxu0 0.0
    %436 = vmatprep.subr.mxu0 0.0
    %437 = vmatpush2.xpose.msra.mxu0 0.0
    %438 = vmatprep.subr.mxu0 0.0
    %439 = vmatpush2.xpose.msra.mxu0 0.0
    %440 = vmatprep.subr.mxu0 0.0
    %441 = vmatpush2.xpose.msra.mxu0 0.0
    %442 = vmatprep.subr.mxu0 0.0
    %443 = vmatpush2.xpose.msra.mxu0 0.0
    %444 = vmatprep.subr.mxu0 0.0
    %445 = vmatpush2.xpose.msra.mxu0 0.0
    %446 = vmatprep.subr.mxu0 0.0
    %447 = vmatpush2.xpose.msra.mxu0 0.0
    %448 = vmatprep.subr.mxu0 0.0
    %449 = vmatpush2.xpose.msra.mxu0 0.0
    %450 = vmatprep.mubr.f32.mxu0 0.0
    %v451 = vand.u32 %v43, 4294901760
    %v452 = vsub.f32 %v43, %v451
    %453 = vmatmul.mubr.f32.gmra.mxu0 %v452
    %v454 = vpop.f32.mrf.mxu0
    %v455 = vadd.f32 %v345, %v454
    %v456 = vpop.f32.mrf.mxu0
    %457 = vmatprep.mubr.f32.mxu0 0.0
    %v458 = vand.u32 %v46, 4294901760
    %v459 = vsub.f32 %v46, %v458
    %460 = vmatmul.mubr.f32.gmra.mxu0 %v459
    %v461 = vpop.f32.mrf.mxu0
    %v462 = vadd.f32 %v351, %v461
    %v463 = vpop.f32.mrf.mxu0
    %464 = vdwg.mxu0
    %465 = vmatprep.subr.mxu0 0.0
    %v466 = vand.u32 %v94, 4294901760
    %467 = vmatpush1.xpose.msra.mxu0 %v466
    %468 = vmatprep.subr.mxu0 0.0
    %v469 = vand.u32 %v91, 4294901760
    %470 = vmatpush1.xpose.msra.mxu0 %v469
    %471 = vmatprep.subr.mxu0 0.0
    %v472 = vand.u32 %v88, 4294901760
    %473 = vmatpush1.xpose.msra.mxu0 %v472
    %474 = vmatprep.subr.mxu0 0.0
    %v475 = vand.u32 %v85, 4294901760
    %476 = vmatpush1.xpose.msra.mxu0 %v475
    %477 = vmatprep.subr.mxu0 0.0
    %v478 = vand.u32 %v82, 4294901760
    %479 = vmatpush1.xpose.msra.mxu0 %v478
    %480 = vmatprep.subr.mxu0 0.0
    %v481 = vand.u32 %v79, 4294901760
    %482 = vmatpush1.xpose.msra.mxu0 %v481
    %483 = vmatprep.subr.mxu0 0.0
    %v484 = vand.u32 %v76, 4294901760
    %485 = vmatpush1.xpose.msra.mxu0 %v484
    %486 = vmatprep.subr.mxu0 0.0
    %v487 = vand.u32 %v73, 4294901760
    %488 = vmatpush1.xpose.msra.mxu0 %v487
    %489 = vmatprep.subr.mxu0 0.0
    %v490 = vand.u32 %v70, 4294901760
    %491 = vmatpush1.xpose.msra.mxu0 %v490
    %492 = vmatprep.subr.mxu0 0.0
    %v493 = vand.u32 %v67, 4294901760
    %494 = vmatpush1.xpose.msra.mxu0 %v493
    %495 = vmatprep.subr.mxu0 0.0
    %v496 = vand.u32 %v64, 4294901760
    %497 = vmatpush1.xpose.msra.mxu0 %v496
    %498 = vmatprep.subr.mxu0 0.0
    %v499 = vand.u32 %v61, 4294901760
    %500 = vmatpush1.xpose.msra.mxu0 %v499
    %501 = vmatprep.subr.mxu0 0.0
    %v502 = vand.u32 %v58, 4294901760
    %503 = vmatpush1.xpose.msra.mxu0 %v502
    %504 = vmatprep.subr.mxu0 0.0
    %v505 = vand.u32 %v55, 4294901760
    %506 = vmatpush1.xpose.msra.mxu0 %v505
    %507 = vmatprep.subr.mxu0 0.0
    %v508 = vand.u32 %v52, 4294901760
    %509 = vmatpush1.xpose.msra.mxu0 %v508
    %510 = vmatprep.subr.mxu0 0.0
    %v511 = vand.u32 %v49, 4294901760
    %512 = vmatpush1.xpose.msra.mxu0 %v511
    %513 = vmatprep.subr.mxu0 0.0
    %514 = vmatpush2.xpose.msra.mxu0 0.0
    %515 = vmatprep.subr.mxu0 0.0
    %516 = vmatpush2.xpose.msra.mxu0 0.0
    %517 = vmatprep.subr.mxu0 0.0
    %518 = vmatpush2.xpose.msra.mxu0 0.0
    %519 = vmatprep.subr.mxu0 0.0
    %520 = vmatpush2.xpose.msra.mxu0 0.0
    %521 = vmatprep.subr.mxu0 0.0
    %522 = vmatpush2.xpose.msra.mxu0 0.0
    %523 = vmatprep.subr.mxu0 0.0
    %524 = vmatpush2.xpose.msra.mxu0 0.0
    %525 = vmatprep.subr.mxu0 0.0
    %526 = vmatpush2.xpose.msra.mxu0 0.0
    %527 = vmatprep.subr.mxu0 0.0
    %528 = vmatpush2.xpose.msra.mxu0 0.0
    %529 = vmatprep.subr.mxu0 0.0
    %530 = vmatpush2.xpose.msra.mxu0 0.0
    %531 = vmatprep.subr.mxu0 0.0
    %532 = vmatpush2.xpose.msra.mxu0 0.0
    %533 = vmatprep.subr.mxu0 0.0
    %534 = vmatpush2.xpose.msra.mxu0 0.0
    %535 = vmatprep.subr.mxu0 0.0
    %536 = vmatpush2.xpose.msra.mxu0 0.0
    %537 = vmatprep.subr.mxu0 0.0
    %538 = vmatpush2.xpose.msra.mxu0 0.0
    %539 = vmatprep.subr.mxu0 0.0
    %540 = vmatpush2.xpose.msra.mxu0 0.0
    %541 = vmatprep.subr.mxu0 0.0
    %542 = vmatpush2.xpose.msra.mxu0 0.0
    %543 = vmatprep.subr.mxu0 0.0
    %544 = vmatpush2.xpose.msra.mxu0 0.0
    %545 = vmatprep.mubr.f32.mxu0 0.0
    %v546 = vand.u32 %v43, 4294901760
    %v547 = vsub.f32 %v43, %v546
    %v548 = vand.u32 %v547, 4294901760
    %549 = vmatmul.mubr.f32.gmra.mxu0 %v548
    %v550 = vpop.f32.mrf.mxu0
    %v551 = vadd.f32 %v455, %v550
    %v552 = vpop.f32.mrf.mxu0
    %553 = vmatprep.mubr.f32.mxu0 0.0
    %v554 = vand.u32 %v46, 4294901760
    %v555 = vsub.f32 %v46, %v554
    %v556 = vand.u32 %v555, 4294901760
    %557 = vmatmul.mubr.f32.gmra.mxu0 %v556
    %v558 = vpop.f32.mrf.mxu0
    %v559 = vadd.f32 %v462, %v558
    %v560 = vpop.f32.mrf.mxu0
    %561 = vdwg.mxu0
    %562 = vmatprep.subr.mxu0 0.0
    %v563 = vand.u32 %v94, 4294901760
    %v564 = vsub.f32 %v94, %v563
    %v565 = vand.u32 %v564, 4294901760
    %566 = vmatpush1.xpose.msra.mxu0 %v565
    %567 = vmatprep.subr.mxu0 0.0
    %v568 = vand.u32 %v91, 4294901760
    %v569 = vsub.f32 %v91, %v568
    %v570 = vand.u32 %v569, 4294901760
    %571 = vmatpush1.xpose.msra.mxu0 %v570
    %572 = vmatprep.subr.mxu0 0.0
    %v573 = vand.u32 %v88, 4294901760
    %v574 = vsub.f32 %v88, %v573
    %v575 = vand.u32 %v574, 4294901760
    %576 = vmatpush1.xpose.msra.mxu0 %v575
    %577 = vmatprep.subr.mxu0 0.0
    %v578 = vand.u32 %v85, 4294901760
    %v579 = vsub.f32 %v85, %v578
    %v580 = vand.u32 %v579, 4294901760
    %581 = vmatpush1.xpose.msra.mxu0 %v580
    %582 = vmatprep.subr.mxu0 0.0
    %v583 = vand.u32 %v82, 4294901760
    %v584 = vsub.f32 %v82, %v583
    %v585 = vand.u32 %v584, 4294901760
    %586 = vmatpush1.xpose.msra.mxu0 %v585
    %587 = vmatprep.subr.mxu0 0.0
    %v588 = vand.u32 %v79, 4294901760
    %v589 = vsub.f32 %v79, %v588
    %v590 = vand.u32 %v589, 4294901760
    %591 = vmatpush1.xpose.msra.mxu0 %v590
    %592 = vmatprep.subr.mxu0 0.0
    %v593 = vand.u32 %v76, 4294901760
    %v594 = vsub.f32 %v76, %v593
    %v595 = vand.u32 %v594, 4294901760
    %596 = vmatpush1.xpose.msra.mxu0 %v595
    %597 = vmatprep.subr.mxu0 0.0
    %v598 = vand.u32 %v73, 4294901760
    %v599 = vsub.f32 %v73, %v598
    %v600 = vand.u32 %v599, 4294901760
    %601 = vmatpush1.xpose.msra.mxu0 %v600
    %602 = vmatprep.subr.mxu0 0.0
    %v603 = vand.u32 %v70, 4294901760
    %v604 = vsub.f32 %v70, %v603
    %v605 = vand.u32 %v604, 4294901760
    %606 = vmatpush1.xpose.msra.mxu0 %v605
    %607 = vmatprep.subr.mxu0 0.0
    %v608 = vand.u32 %v67, 4294901760
    %v609 = vsub.f32 %v67, %v608
    %v610 = vand.u32 %v609, 4294901760
    %611 = vmatpush1.xpose.msra.mxu0 %v610
    %612 = vmatprep.subr.mxu0 0.0
    %v613 = vand.u32 %v64, 4294901760
    %v614 = vsub.f32 %v64, %v613
    %v615 = vand.u32 %v614, 4294901760
    %616 = vmatpush1.xpose.msra.mxu0 %v615
    %617 = vmatprep.subr.mxu0 0.0
    %v618 = vand.u32 %v61, 4294901760
    %v619 = vsub.f32 %v61, %v618
    %v620 = vand.u32 %v619, 4294901760
    %621 = vmatpush1.xpose.msra.mxu0 %v620
    %622 = vmatprep.subr.mxu0 0.0
    %v623 = vand.u32 %v58, 4294901760
    %v624 = vsub.f32 %v58, %v623
    %v625 = vand.u32 %v624, 4294901760
    %626 = vmatpush1.xpose.msra.mxu0 %v625
    %627 = vmatprep.subr.mxu0 0.0
    %v628 = vand.u32 %v55, 4294901760
    %v629 = vsub.f32 %v55, %v628
    %v630 = vand.u32 %v629, 4294901760
    %631 = vmatpush1.xpose.msra.mxu0 %v630
    %632 = vmatprep.subr.mxu0 0.0
    %v633 = vand.u32 %v52, 4294901760
    %v634 = vsub.f32 %v52, %v633
    %v635 = vand.u32 %v634, 4294901760
    %636 = vmatpush1.xpose.msra.mxu0 %v635
    %637 = vmatprep.subr.mxu0 0.0
    %v638 = vand.u32 %v49, 4294901760
    %v639 = vsub.f32 %v49, %v638
    %v640 = vand.u32 %v639, 4294901760
    %641 = vmatpush1.xpose.msra.mxu0 %v640
    %642 = vmatprep.subr.mxu0 0.0
    %643 = vmatpush2.xpose.msra.mxu0 0.0
    %644 = vmatprep.subr.mxu0 0.0
    %645 = vmatpush2.xpose.msra.mxu0 0.0
    %646 = vmatprep.subr.mxu0 0.0
    %647 = vmatpush2.xpose.msra.mxu0 0.0
    %648 = vmatprep.subr.mxu0 0.0
    %649 = vmatpush2.xpose.msra.mxu0 0.0
    %650 = vmatprep.subr.mxu0 0.0
    %651 = vmatpush2.xpose.msra.mxu0 0.0
    %652 = vmatprep.subr.mxu0 0.0
    %653 = vmatpush2.xpose.msra.mxu0 0.0
    %654 = vmatprep.subr.mxu0 0.0
    %655 = vmatpush2.xpose.msra.mxu0 0.0
    %656 = vmatprep.subr.mxu0 0.0
    %657 = vmatpush2.xpose.msra.mxu0 0.0
    %658 = vmatprep.subr.mxu0 0.0
    %659 = vmatpush2.xpose.msra.mxu0 0.0
    %660 = vmatprep.subr.mxu0 0.0
    %661 = vmatpush2.xpose.msra.mxu0 0.0
    %662 = vmatprep.subr.mxu0 0.0
    %663 = vmatpush2.xpose.msra.mxu0 0.0
    %664 = vmatprep.subr.mxu0 0.0
    %665 = vmatpush2.xpose.msra.mxu0 0.0
    %666 = vmatprep.subr.mxu0 0.0
    %667 = vmatpush2.xpose.msra.mxu0 0.0
    %668 = vmatprep.subr.mxu0 0.0
    %669 = vmatpush2.xpose.msra.mxu0 0.0
    %670 = vmatprep.subr.mxu0 0.0
    %671 = vmatpush2.xpose.msra.mxu0 0.0
    %672 = vmatprep.subr.mxu0 0.0
    %673 = vmatpush2.xpose.msra.mxu0 0.0
    %674 = vmatprep.mubr.f32.mxu0 0.0
    %v675 = vand.u32 %v43, 4294901760
    %676 = vmatmul.mubr.f32.gmra.mxu0 %v675
    %v677 = vpop.f32.mrf.mxu0
    %v678 = vadd.f32 %v551, %v677
    %v679 = vpop.f32.mrf.mxu0
    %680 = vmatprep.mubr.f32.mxu0 0.0
    %v681 = vand.u32 %v46, 4294901760
    %682 = vmatmul.mubr.f32.gmra.mxu0 %v681
    %v683 = vpop.f32.mrf.mxu0
    %v684 = vadd.f32 %v559, %v683
    %v685 = vpop.f32.mrf.mxu0
    %686 = vdwg.mxu0
    %687 = vmatprep.subr.mxu0 0.0
    %v688 = vand.u32 %v94, 4294901760
    %689 = vmatpush1.xpose.msra.mxu0 %v688
    %690 = vmatprep.subr.mxu0 0.0
    %v691 = vand.u32 %v91, 4294901760
    %692 = vmatpush1.xpose.msra.mxu0 %v691
    %693 = vmatprep.subr.mxu0 0.0
    %v694 = vand.u32 %v88, 4294901760
    %695 = vmatpush1.xpose.msra.mxu0 %v694
    %696 = vmatprep.subr.mxu0 0.0
    %v697 = vand.u32 %v85, 4294901760
    %698 = vmatpush1.xpose.msra.mxu0 %v697
    %699 = vmatprep.subr.mxu0 0.0
    %v700 = vand.u32 %v82, 4294901760
    %701 = vmatpush1.xpose.msra.mxu0 %v700
    %702 = vmatprep.subr.mxu0 0.0
    %v703 = vand.u32 %v79, 4294901760
    %704 = vmatpush1.xpose.msra.mxu0 %v703
    %705 = vmatprep.subr.mxu0 0.0
    %v706 = vand.u32 %v76, 4294901760
    %707 = vmatpush1.xpose.msra.mxu0 %v706
    %708 = vmatprep.subr.mxu0 0.0
    %v709 = vand.u32 %v73, 4294901760
    %710 = vmatpush1.xpose.msra.mxu0 %v709
    %711 = vmatprep.subr.mxu0 0.0
    %v712 = vand.u32 %v70, 4294901760
    %713 = vmatpush1.xpose.msra.mxu0 %v712
    %714 = vmatprep.subr.mxu0 0.0
    %v715 = vand.u32 %v67, 4294901760
    %716 = vmatpush1.xpose.msra.mxu0 %v715
    %717 = vmatprep.subr.mxu0 0.0
    %v718 = vand.u32 %v64, 4294901760
    %719 = vmatpush1.xpose.msra.mxu0 %v718
    %720 = vmatprep.subr.mxu0 0.0
    %v721 = vand.u32 %v61, 4294901760
    %722 = vmatpush1.xpose.msra.mxu0 %v721
    %723 = vmatprep.subr.mxu0 0.0
    %v724 = vand.u32 %v58, 4294901760
    %725 = vmatpush1.xpose.msra.mxu0 %v724
    %726 = vmatprep.subr.mxu0 0.0
    %v727 = vand.u32 %v55, 4294901760
    %728 = vmatpush1.xpose.msra.mxu0 %v727
    %729 = vmatprep.subr.mxu0 0.0
    %v730 = vand.u32 %v52, 4294901760
    %731 = vmatpush1.xpose.msra.mxu0 %v730
    %732 = vmatprep.subr.mxu0 0.0
    %v733 = vand.u32 %v49, 4294901760
    %734 = vmatpush1.xpose.msra.mxu0 %v733
    %735 = vmatprep.subr.mxu0 0.0
    %736 = vmatpush2.xpose.msra.mxu0 0.0
    %737 = vmatprep.subr.mxu0 0.0
    %738 = vmatpush2.xpose.msra.mxu0 0.0
    %739 = vmatprep.subr.mxu0 0.0
    %740 = vmatpush2.xpose.msra.mxu0 0.0
    %741 = vmatprep.subr.mxu0 0.0
    %742 = vmatpush2.xpose.msra.mxu0 0.0
    %743 = vmatprep.subr.mxu0 0.0
    %744 = vmatpush2.xpose.msra.mxu0 0.0
    %745 = vmatprep.subr.mxu0 0.0
    %746 = vmatpush2.xpose.msra.mxu0 0.0
    %747 = vmatprep.subr.mxu0 0.0
    %748 = vmatpush2.xpose.msra.mxu0 0.0
    %749 = vmatprep.subr.mxu0 0.0
    %750 = vmatpush2.xpose.msra.mxu0 0.0
    %751 = vmatprep.subr.mxu0 0.0
    %752 = vmatpush2.xpose.msra.mxu0 0.0
    %753 = vmatprep.subr.mxu0 0.0
    %754 = vmatpush2.xpose.msra.mxu0 0.0
    %755 = vmatprep.subr.mxu0 0.0
    %756 = vmatpush2.xpose.msra.mxu0 0.0
    %757 = vmatprep.subr.mxu0 0.0
    %758 = vmatpush2.xpose.msra.mxu0 0.0
    %759 = vmatprep.subr.mxu0 0.0
    %760 = vmatpush2.xpose.msra.mxu0 0.0
    %761 = vmatprep.subr.mxu0 0.0
    %762 = vmatpush2.xpose.msra.mxu0 0.0
    %763 = vmatprep.subr.mxu0 0.0
    %764 = vmatpush2.xpose.msra.mxu0 0.0
    %765 = vmatprep.subr.mxu0 0.0
    %766 = vmatpush2.xpose.msra.mxu0 0.0
    %767 = vmatprep.mubr.f32.mxu0 0.0
    %v768 = vand.u32 %v43, 4294901760
    %769 = vmatmul.mubr.f32.gmra.mxu0 %v768
    %v770 = vpop.f32.mrf.mxu0
    %v771 = vadd.f32 %v678, %v770
    %v772 = vpop.f32.mrf.mxu0
    %773 = vmatprep.mubr.f32.mxu0 0.0
    %v774 = vand.u32 %v46, 4294901760
    %775 = vmatmul.mubr.f32.gmra.mxu0 %v774
    %v776 = vpop.f32.mrf.mxu0
    %v777 = vadd.f32 %v684, %v776
    %v778 = vpop.f32.mrf.mxu0
    %779 = vdwg.mxu0
    %v780 = vadd.f32 %v39, %v771
    %v781 = vadd.f32 %v40, %v777
    %782 = vst [vmem:[#allocation2] sm:$0xff] %v780
    %783 = vst [vmem:[#allocation2 + $0x8] sm:$0xff] %v781
    // Predicated region
    $region18: #{tpu_custom_call.1} parent=1 // pred_check
      %p784 = pneg %p15
    $region19: #{tpu_custom_call.1} parent=1 // pred_check_branch
      %786 = sbr.rel (%p784) target = $region21
    $region20: #{tpu_custom_call.1} parent=1 // pred_region
      %v787 = vld [vmem:[#allocation2] sm:$0xff]
      %v788 = vld [vmem:[#allocation2 + $0x8] sm:$0xff]
      %v789 = vld [vmem:[%s2] sm:$0x1]
      %v791 = vlaneseq
      %v792 = vshrl.u32 %v791, 7
      %v793 = vsub.s32 0, %v792
      %v794 = vrot.slane %v789, %v793
      %v796 = vadd.f32 %v787, %v794
      %v797 = vadd.f32 %v788, %v794
      %798 = vst [vmem:[#allocation2] sm:$0xff] %v796
      %799 = vst [vmem:[#allocation2 + $0x8] sm:$0xff] %v797
    $region21: #{tpu_custom_call.1} parent=1 // pred_fallthru
      _
    // Predicated region
    $region22: #{tpu_custom_call.1} parent=1 // pred_check
      _
    $region23: #{tpu_custom_call.1} parent=1 // pred_check_branch
      %801 = sbr.rel (0) target = $region25
    $region24: #{tpu_custom_call.1} parent=1 // pred_region
      %s803 = ssub.s32 256, 256
      %804 = vsyncadd [#allocation3], %s803
      %s805 = sshll.u32 [#allocation2], 4
      %s806 = int_to_ptr.vmem [resolvable:$true] %s805
      %811 = dma.vmem_to_hbm [thread:$0]  %s806, 256, %s3, [#allocation3], 128, 128, 8
    $region25: #{tpu_custom_call.1} parent=1 // pred_fallthru
      _
    // Predicated region
    $region26: #{tpu_custom_call.1} parent=1 // pred_check
      _
    $region27: #{tpu_custom_call.1} parent=1 // pred_check_branch
      %813 = sbr.rel (0) target = $region29
    $region28: #{tpu_custom_call.1} parent=1 // pred_region
      %814 = dma.done [#allocation3], 256
    $region29: #{tpu_custom_call.1} parent=1 // pred_fallthru
      _
    %815 = vsyncpa [#allocation3], 1

</llo_original>
